<compile_context>
chip_gen: v5e
topology: v5e:2x2
jax: 0.10.0
libtpu: 0.0.40
codegen_flags: <defaults>
</compile_context>

<pallas_src>
import math

import jax
import jax.numpy as jnp
from jax.experimental import pallas as pl
from jax.experimental.pallas import tpu as pltpu

_N_DMA = 8   # outstanding row DMAs in the HBM-gather path
_ROWS = 8    # rows gathered per iteration in the loop path (one sublane group)


def _round_up(a, b):
    return (a + b - 1) // b * b


def _vmem_capacity_bytes():
    """Physical VMEM per core (128 MiB on v5e/v6e, 64 MiB on v7x)."""
    try:
        return int(pltpu.get_tpu_info().vmem_capacity_bytes)
    except Exception:
        return 64 << 20          # conservative (v7x-sized) default


def _pick_token_block(nt, d, itemsize, tile_budget, token_block):
    """Token-block size: multiple of 16 (covers f32 sublane=8 and bf16 packing)
    so the (TB, D) output tile is sublane/lane dense; bounded by the per-tile
    VMEM budget; prefers an exact divisor of nt so no padding (and no
    post-kernel slice copy) is needed."""
    cap = max(16, (tile_budget // max(1, d * itemsize)) // 16 * 16)
    tb = max(16, min(int(token_block), cap) // 16 * 16)
    if nt % 16 == 0 and nt >= 16:
        lo = max(16, (tb // 2) // 16 * 16)
        for cand in range(min(tb, nt), lo - 1, -16):
            if nt % cand == 0:
                return cand
    return min(tb, _round_up(nt, 16))


# --------------------------------------------------------------------------
# Kernels
# --------------------------------------------------------------------------
def _embed_onehot_kernel(idx_ref, w_ref, out_ref):
    """Gather TB table rows via a one-hot MXU matmul (small V only).

    idx_ref: (1, TB, 1) int32 in VMEM -- token ids laid out along sublanes so
             the one-hot is built directly as (TB, V): no operand transpose.
    w_ref:   (V, D) embedding table, resident in VMEM.
    out_ref: (TB, D) lane/sublane-dense output tile.
    """
    v = w_ref.shape[0]
    tb = out_ref.shape[0]
    idx_col = idx_ref[0]                                            # (TB, 1)
    vocab_iota = jax.lax.broadcasted_iota(jnp.int32, (tb, v), 1)    # (TB, V)
    onehot = (vocab_iota == idx_col).astype(w_ref.dtype)            # (TB, V)
    # Exact gather needs full f32 precision on the MXU for f32 tables.
    prec = jax.lax.Precision.HIGHEST if w_ref.dtype == jnp.float32 else None
    out_ref[...] = jax.lax.dot_general(
        onehot, w_ref[...],
        dimension_numbers=(((1,), (0,)), ((), ())),
        preferred_element_type=jnp.float32,
        precision=prec,
    ).astype(out_ref.dtype)


def _embed_loop_kernel(idx_ref, w_ref, out_ref):
    """Row-copy gather from a VMEM-resident table (larger V).

    idx_ref: (NT_pad,) int32 in SMEM (scalar-prefetched token ids).
    w_ref:   (V, D) embedding table, resident in VMEM.
    out_ref: (TB, D) output tile.

    Gathers _ROWS (=8) rows per iteration and writes one full (8, D)
    sublane-aligned slab per iteration (unmasked vector stores).
    """
    tb = out_ref.shape[0]
    block_off = pl.multiple_of(pl.program_id(0) * tb, _ROWS)

    def body(i, carry):
        base = pl.multiple_of(i * _ROWS, _ROWS)
        rows = [w_ref[pl.ds(idx_ref[block_off + base + r], 1), :]
                for r in range(_ROWS)]
        out_ref[pl.ds(base, _ROWS), :] = jnp.concatenate(rows, axis=0)
        return carry

    jax.lax.fori_loop(0, tb // _ROWS, body, None)


def _embed_dma_kernel(idx_ref, w_hbm, out_ref, stage, sems):
    """Gather TB rows straight from the HBM-resident table with manual DMAs.

    idx_ref: (NT_pad,) int32 in SMEM (scalar-prefetched token ids).
    w_hbm:   (V, D) table ref left in HBM (memory_space=pl.ANY).
    out_ref: (TB, D) output tile (VMEM).
    stage:   (TB, D) VMEM staging buffer.
    sems:    (_N_DMA,) DMA semaphores -> up to _N_DMA row copies in flight.
    """
    tb = out_ref.shape[0]
    block_off = pl.program_id(0) * tb

    def row_copy(tok, j):
        return pltpu.make_async_copy(
            w_hbm.at[pl.ds(tok, 1), :],        # one (1, D) table row in HBM
            stage.at[pl.ds(j, 1), :],          # its slot in the staging tile
            sems.at[j % _N_DMA])

    # Prime the pipeline with the first _N_DMA row copies.
    for j in range(min(_N_DMA, tb)):
        row_copy(idx_ref[block_off + j], j).start()

    def body(j, carry):
        nxt = j + _N_DMA
        # Read the next token id *before* the DMA wait (a wait breaks SMEM
        # store->load forwarding for later scalar reads).
        tok_next = idx_ref[block_off + jnp.minimum(nxt, tb - 1)]
        row_copy(0, j).wait()                  # src index irrelevant for wait

        @pl.when(nxt < tb)
        def _():
            row_copy(tok_next, nxt).start()

        return carry

    jax.lax.fori_loop(0, tb, body, None)

    # One dense (TB, D) store of the gathered tile.
    out_ref[...] = stage[...]


# --------------------------------------------------------------------------
# Wrapper
# --------------------------------------------------------------------------
def word_embedding(x, w_embed, *, token_block=256, onehot_vocab_limit=None,
                   gather_mode=None):
    """Pallas equivalent of `out = W_embed[x]`.

    Args:
      x:            int array of shape (N, T); indices are clamped to [0, V)
                    (PyTorch nn.Embedding would raise on OOB -- documented
                    behavioral difference).
      w_embed:      float array of shape (V, D).
      token_block:  upper bound on tokens gathered per grid step.
      onehot_vocab_limit: largest V for the one-hot MXU path (None -> dtype and
                    roofline aware default; the gather is HBM-bound so the
                    one-hot matmul must stay below the compute roofline).
      gather_mode:  None (auto) or one of "onehot" / "loop" / "dma".

    Returns:
      Array of shape (N, T, D), dtype of w_embed.
    """
    N, T = x.shape
    V, D = w_embed.shape
    NT = N * T
    itemsize = jnp.dtype(w_embed.dtype).itemsize

    if onehot_vocab_limit is None:
        # One-hot arithmetic intensity is 2V/itemsize flop per output byte;
        # keep it comfortably memory-bound on v5e/v6e/v7x, and lower for fp32
        # tables (fp32 MXU runs at a fraction of the bf16 rate).
        onehot_vocab_limit = 512 if itemsize <= 2 else 256

    # ---- generation-aware VMEM budgeting ---------------------------------
    cap = _vmem_capacity_bytes()
    resident_budget = (cap * 3) // 4          # ~48 MiB on v7x, ~96 MiB v5e/v6e
    tile_budget = max(1 << 20, min(8 << 20, resident_budget // 8))

    tb = _pick_token_block(NT, D, itemsize, tile_budget, token_block)
    nt_pad = _round_up(NT, tb)
    nb = nt_pad // tb

    margin = 2 << 20
    out_tile_bytes = 2 * tb * D * itemsize            # double-buffered output
    # Budget the table at 2x: Pallas double-buffers inputs by default.  The
    # grid-invariant table BlockSpec additionally requests Buffered(1), so the
    # real footprint is usually half of this (the budget stays conservative).
    table_vmem = 2 * V * D * itemsize
    needed_loop = table_vmem + out_tile_bytes + _ROWS * D * itemsize + margin
    needed_onehot = table_vmem + out_tile_bytes + tb * V * 4 + 2 * tb * 4 + margin
    needed_dma = out_tile_bytes + tb * D * itemsize + margin

    if gather_mode is None:
        if V <= onehot_vocab_limit and needed_onehot <= resident_budget:
            gather_mode = "onehot"
        elif needed_loop <= resident_budget:
            gather_mode = "loop"
        else:
            gather_mode = "dma"
    if gather_mode not in ("onehot", "loop", "dma"):
        raise ValueError(f"unknown gather_mode: {gather_mode!r}")

    needed = {"onehot": needed_onehot, "loop": needed_loop,
              "dma": needed_dma}[gather_mode]
    if gather_mode != "dma" and needed > resident_budget:
        raise ValueError("embedding table too large for the VMEM-resident "
                         "gather path; use gather_mode='dma'")
    # TODO(synk): for very large D on v7x, add a D-tiling grid axis so a
    # resident (V, d_tile) column slab stays on the fast on-chip path instead
    # of falling back to the DMA gather.
    vmem_limit = int(min(max(needed + (4 << 20), 32 << 20), cap - (4 << 20)))

    # ---- host-side index prep (clamp, pad, block) -------------------------
    # Clamp so malformed indices cannot drive OOB row reads / DMAs.
    x_flat = jnp.clip(x.reshape(NT).astype(jnp.int32), 0, V - 1)
    if nt_pad != NT:
        x_flat = jnp.pad(x_flat, (0, nt_pad - NT))    # pad with row 0 (valid)
    # TODO(synk): for extremely large N*T the scalar-prefetched index array is
    # bounded by SMEM capacity; chunk the token axis host-side in that case.

    out_dtype = w_embed.dtype
    out_shape = jax.ShapeDtypeStruct((nt_pad, D), out_dtype)
    compiler_params = pltpu.CompilerParams(
        # Disjoint output tile per grid step -> token blocks can be sharded
        # over the two TensorCores on v7x (harmless on v5e/v6e).
        dimension_semantics=("parallel",),
        vmem_limit_bytes=vmem_limit,
    )
    table_bytes_hbm = V * D * itemsize

    if gather_mode == "dma":
        cost = pl.CostEstimate(
            flops=0, transcendentals=0,
            bytes_accessed=2 * nt_pad * D * itemsize + nt_pad * 4)
        gs = pltpu.PrefetchScalarGridSpec(
            num_scalar_prefetch=1, grid=(nb,),
            in_specs=[pl.BlockSpec(memory_space=pl.ANY)],   # table stays in HBM
            out_specs=pl.BlockSpec((tb, D), lambda b, idx: (b, 0)),
            scratch_shapes=[pltpu.VMEM((tb, D), out_dtype),
                            pltpu.SemaphoreType.DMA((_N_DMA,))])
        out_flat = pl.pallas_call(
            _embed_dma_kernel, out_shape=out_shape, grid_spec=gs,
            compiler_params=compiler_params, cost_estimate=cost,
        )(x_flat, w_embed)
    else:
        def run(single_buffer_table):
            if gather_mode == "onehot":
                table_spec = (
                    pl.BlockSpec((V, D), lambda b: (0, 0),
                                 pipeline_mode=pl.Buffered(buffer_count=1))
                    if single_buffer_table else
                    pl.BlockSpec((V, D), lambda b: (0, 0)))
                cost = pl.CostEstimate(
                    flops=2 * nt_pad * V * D, transcendentals=0,
                    bytes_accessed=(table_bytes_hbm + nt_pad * 4
                                    + nt_pad * D * itemsize))
                # Indices delivered as (nb, tb, 1): block (1, tb, 1) has a
                # sublane-aligned second-to-last dim and a full last dim, and
                # the one-hot is built directly as (TB, V) -> no MXU-operand
                # transpose in the kernel.
                return pl.pallas_call(
                    _embed_onehot_kernel,
                    out_shape=out_shape,
                    grid=(nb,),
                    in_specs=[pl.BlockSpec((1, tb, 1), lambda b: (b, 0, 0)),
                              table_spec],
                    out_specs=pl.BlockSpec((tb, D), lambda b: (b, 0)),
                    compiler_params=compiler_params,
                    cost_estimate=cost,
                )(x_flat.reshape(nb, tb, 1), w_embed)
            else:  # "loop"
                table_spec = (
                    pl.BlockSpec((V, D), lambda b, idx: (0, 0),
                                 pipeline_mode=pl.Buffered(buffer_count=1))
                    if single_buffer_table else
                    pl.BlockSpec((V, D), lambda b, idx: (0, 0)))
                cost = pl.CostEstimate(
                    flops=0, transcendentals=0,
                    bytes_accessed=(table_bytes_hbm + nt_pad * 4
                                    + nt_pad * D * itemsize))
                gs = pltpu.PrefetchScalarGridSpec(
                    num_scalar_prefetch=1, grid=(nb,),
                    in_specs=[table_spec],
                    out_specs=pl.BlockSpec((tb, D), lambda b, idx: (b, 0)))
                return pl.pallas_call(
                    _embed_loop_kernel, out_shape=out_shape, grid_spec=gs,
                    compiler_params=compiler_params, cost_estimate=cost,
                )(x_flat, w_embed)

        try:
            # Grid-invariant table: one VMEM buffer suffices (fetched once).
            out_flat = run(True)
        except Exception:
            # pipeline_mode=Buffered(1) unsupported on this Pallas version ->
            # fall back to the default double-buffered table (budgeted for).
            out_flat = run(False)

    out_flat = out_flat if nt_pad == NT else out_flat[:NT]
    return out_flat.reshape(N, T, D)


if __name__ == "__main__":
    # Small shapes consistent with the module's forward:
    #   minibatch N=2, sequence length T=8, vocab V=16, embed dim D=128.
    N, T, V, D = 2, 8, 16, 128

    key = jax.random.PRNGKey(0)
    k_w, k_x = jax.random.split(key)

    # Deterministic parameter init matching torch.randn(V, D).div(sqrt(V)).
    w_embed = jax.random.normal(k_w, (V, D), dtype=jnp.float32) / math.sqrt(V)
    x = jax.random.randint(k_x, (N, T), minval=0, maxval=V, dtype=jnp.int32)

    ref = w_embed[x]   # plain-JAX advanced indexing == PyTorch W_embed[x]

    # Auto path (small V, fp32 -> one-hot MXU gather).
    out = jax.block_until_ready(word_embedding(x, w_embed))
    assert out.shape == (N, T, D)
    assert jnp.allclose(out, ref, rtol=1e-6, atol=1e-6), "one-hot path mismatch"

    # VMEM-resident loop gather (exact row copies).
    out_loop = jax.block_until_ready(word_embedding(x, w_embed,
                                                    gather_mode="loop"))
    assert jnp.array_equal(out_loop, ref), "loop path mismatch"

    # HBM-resident manual-DMA gather (exact row copies).
    out_dma = jax.block_until_ready(word_embedding(x, w_embed,
                                                   gather_mode="dma"))
    assert jnp.array_equal(out_dma, ref), "dma path mismatch"

    print("KERNEL_OK")
</pallas_src>

<mosaic_0001>
module attributes {stable_mosaic.version = 11 : i64} {
  func.func @_embed_onehot_kernel(%arg0: i32, %arg1: memref<1x16x1xi32, #tpu.memory_space<vmem>>, %arg2: memref<16x128xf32, #tpu.memory_space<vmem>>, %arg3: memref<16x128xf32, #tpu.memory_space<vmem>>) attributes {dimension_semantics = [#tpu.dimension_semantics<parallel>], iteration_bounds = array<i64: 1>, scalar_prefetch = 0 : i64, scratch_operands = 0 : i64, tpu.core_type = #tpu.core_type<tc>, window_params = [{transform_indices = @transform_0, window_bounds = array<i64: 1, 16, 1>}, {pipeline_mode = #tpu.pipeline_mode<synchronous>, transform_indices = @transform_1, window_bounds = array<i64: 16, 128>}, {transform_indices = @transform_2, window_bounds = array<i64: 16, 128>}]} {
    %c0 = arith.constant 0 : index
    %c0_0 = arith.constant 0 : index
    %c0_1 = arith.constant 0 : index
    %0 = vector.load %arg1[%c0, %c0_0, %c0_1] : memref<1x16x1xi32, #tpu.memory_space<vmem>>, vector<1x16x1xi32>
    %1 = vector.shape_cast %0 : vector<1x16x1xi32> to vector<16x1xi32>
    %2 = tpu.iota {dimensions = array<i32: 1>} : vector<16x16xi32>
    %3 = vector.broadcast %1 : vector<16x1xi32> to vector<16x16xi32>
    %4 = arith.cmpi eq, %2, %3 : vector<16x16xi32>
    %5 = arith.extui %4 : vector<16x16xi1> to vector<16x16xi32>
    %6 = arith.sitofp %5 : vector<16x16xi32> to vector<16x16xf32>
    %c0_2 = arith.constant 0 : index
    %c0_3 = arith.constant 0 : index
    %7 = vector.load %arg2[%c0_2, %c0_3] : memref<16x128xf32, #tpu.memory_space<vmem>>, vector<16x128xf32>
    %cst = arith.constant dense<0.000000e+00> : vector<16x128xf32>
    %8 = tpu.matmul %6, %7, %cst {dimension_numbers = #tpu.dot_dimension_numbers<[1], [0], [0], [1], [0, 0, 1, 1], [], []>, precision = #tpu.contract_precision<fp32>} : vector<16x16xf32>, vector<16x128xf32>, vector<16x128xf32> -> vector<16x128xf32>
    %c0_4 = arith.constant 0 : index
    %c0_5 = arith.constant 0 : index
    %9 = vector.load %arg3[%c0_4, %c0_5] : memref<16x128xf32, #tpu.memory_space<vmem>>, vector<16x128xf32>
    tpu.vector_store %arg3[%c0_4, %c0_5], %8 {strides = array<i32>} : memref<16x128xf32, #tpu.memory_space<vmem>>, vector<16x128xf32>,
    return
  }
  func.func @transform_0(%arg0: i32) -> (i32, i32, i32) {
    %c0_i32 = arith.constant 0 : i32
    %c0_i32_0 = arith.constant 0 : i32
    %c0_i32_1 = arith.constant 0 : i32
    return %arg0, %c0_i32, %c0_i32_0 : i32, i32, i32
  }
  func.func @transform_1(%arg0: i32) -> (i32, i32) {
    %c0_i32 = arith.constant 0 : i32
    %c0_i32_0 = arith.constant 0 : i32
    %c0_i32_1 = arith.constant 0 : i32
    return %c0_i32, %c0_i32_0 : i32, i32
  }
  func.func @transform_2(%arg0: i32) -> (i32, i32) {
    %c0_i32 = arith.constant 0 : i32
    %c0_i32_0 = arith.constant 0 : i32
    return %arg0, %c0_i32 : i32, i32
  }
}

module attributes {stable_mosaic.version = 11 : i64} {
  func.func @_embed_onehot_kernel(%arg0: i32, %arg1: memref<1x16x1xi32, #tpu.memory_space<vmem>>, %arg2: memref<16x128xf32, #tpu.memory_space<vmem>>, %arg3: memref<16x128xf32, #tpu.memory_space<vmem>>) attributes {dimension_semantics = [#tpu.dimension_semantics<parallel>], iteration_bounds = array<i64: 1>, scalar_prefetch = 0 : i64, scratch_operands = 0 : i64, tpu.core_type = #tpu.core_type<tc>, window_params = [{transform_indices = @transform_0, window_bounds = array<i64: 1, 16, 1>}, {pipeline_mode = #tpu.pipeline_mode<synchronous>, transform_indices = @transform_1, window_bounds = array<i64: 16, 128>}, {transform_indices = @transform_2, window_bounds = array<i64: 16, 128>}]} {
    %c0 = arith.constant 0 : index
    %c0_0 = arith.constant 0 : index
    %c0_1 = arith.constant 0 : index
    %0 = vector.load %arg1[%c0, %c0_0, %c0_1] : memref<1x16x1xi32, #tpu.memory_space<vmem>>, vector<1x16x1xi32>
    %1 = vector.shape_cast %0 : vector<1x16x1xi32> to vector<16x1xi32>
    %2 = tpu.iota {dimensions = array<i32: 1>} : vector<16x16xi32>
    %3 = vector.broadcast %1 : vector<16x1xi32> to vector<16x16xi32>
    %4 = arith.cmpi eq, %2, %3 : vector<16x16xi32>
    %5 = arith.extui %4 : vector<16x16xi1> to vector<16x16xi32>
    %6 = arith.sitofp %5 : vector<16x16xi32> to vector<16x16xf32>
    %c0_2 = arith.constant 0 : index
    %c0_3 = arith.constant 0 : index
    %7 = vector.load %arg2[%c0_2, %c0_3] : memref<16x128xf32, #tpu.memory_space<vmem>>, vector<16x128xf32>
    %cst = arith.constant dense<0.000000e+00> : vector<16x128xf32>
    %8 = tpu.matmul %6, %7, %cst {dimension_numbers = #tpu.dot_dimension_numbers<[1], [0], [0], [1], [0, 0, 1, 1], [], []>, precision = #tpu.contract_precision<fp32>} : vector<16x16xf32>, vector<16x128xf32>, vector<16x128xf32> -> vector<16x128xf32>
    %c0_4 = arith.constant 0 : index
    %c0_5 = arith.constant 0 : index
    %9 = vector.load %arg3[%c0_4, %c0_5] : memref<16x128xf32, #tpu.memory_space<vmem>>, vector<16x128xf32>
    tpu.vector_store %arg3[%c0_4, %c0_5], %8 {strides = array<i32>} : memref<16x128xf32, #tpu.memory_space<vmem>>, vector<16x128xf32>,
    return
  }
  func.func @transform_0(%arg0: i32) -> (i32, i32, i32) {
    %c0_i32 = arith.constant 0 : i32
    %c0_i32_0 = arith.constant 0 : i32
    %c0_i32_1 = arith.constant 0 : i32
    return %arg0, %c0_i32, %c0_i32_0 : i32, i32, i32
  }
  func.func @transform_1(%arg0: i32) -> (i32, i32) {
    %c0_i32 = arith.constant 0 : i32
    %c0_i32_0 = arith.constant 0 : i32
    %c0_i32_1 = arith.constant 0 : i32
    return %c0_i32, %c0_i32_0 : i32, i32
  }
  func.func @transform_2(%arg0: i32) -> (i32, i32) {
    %c0_i32 = arith.constant 0 : i32
    %c0_i32_0 = arith.constant 0 : i32
    return %arg0, %c0_i32 : i32, i32
  }
}

</mosaic_0001>

<llo_original>
// kernel: tpu_custom_call.1
$region0: #{tpu_custom_call.1}
  #allocation0 [shape = 'u32[]', space=smem, size = 0x4, offset = 0x4, fixed_abs, tag = 'smem constant byte address 0x4 - core index']
  #allocation1 [shape = 'u32[72,128]{1,0:T(1,128)}', space=vmem, size = 0x9000, scoped, tag = 'internal scratch']
  %s0 = inlined_call_operand.vmem [shape: s32[1,16,1], index: 0, kind: input, shape index: {}]
  %s1 = inlined_call_operand.vmem [shape: f32[16,128], index: 1, kind: input, shape index: {}]
  %s2 = inlined_call_operand.hbm [shape: f32[16,128], index: 2, kind: output, shape index: {}]
  %s3 = sld [smem:[#allocation0]]
  $region18: #{tpu_custom_call.1} parent=0
    _
  %s5 = ssub.s32 1, %s3
  %s6 = scalar_select 0, %s5, %s3
  $region1: #{tpu_custom_call.1} parent=0
    #allocation2 [shape = 'u8[8192]{0}', space=vmem, size = 0x2000, scoped, tag = 'output window, operand 0, single buffered']
    #allocation3 [shape = 's32[1]{0}', space=sflag, size = 0x4, scoped, tag = 'scoped memory for tpu_custom_call.1']
    %7 = vsyncpa [#allocation3], 0
    // Predicated region
    $region2: #{tpu_custom_call.1} parent=1 // pred_check
      _
    $region3: #{tpu_custom_call.1} parent=1 // pred_check_branch
      %9 = sbr.rel (0) target = $region5
    $region4: #{tpu_custom_call.1} parent=1 // pred_region
      _
    $region5: #{tpu_custom_call.1} parent=1 // pred_fallthru
      _
    // Predicated region
    $region6: #{tpu_custom_call.1} parent=1 // pred_check
      _
    $region7: #{tpu_custom_call.1} parent=1 // pred_check_branch
      %11 = sbr.rel (0) target = $region9
    $region8: #{tpu_custom_call.1} parent=1 // pred_region
      _
    $region9: #{tpu_custom_call.1} parent=1 // pred_fallthru
      _
    %v12 = vld [vmem:[%s0] sm:$0xff]
    %v13 = vld [vmem:[%s0 + $0x8] sm:$0xff]
    %v14 = vlaneseq
    %v15 = vand.u32 %v14, 127
    %16 = vset.pattern.permute.xlu0 0
    %17 = vperm.xlu0 %16, %v12
    %v18 = vpop.permute.xlu0 %17
    %19 = vset.pattern.permute.xlu0 0
    %20 = vperm.xlu0 %19, %v13
    %v21 = vpop.permute.xlu0 %20
    %vm22 = vcmp.eq.s32.totalorder %v15, %v18
    %vm23 = vcmp.eq.s32.totalorder %v15, %v21
    %v24 = vsel %vm22, 1, 0
    %v25 = vsel %vm23, 1, 0
    %v26 = vcvt.s32.f32 %v24
    %v27 = vcvt.s32.f32 %v25
    %v28 = vld [vmem:[%s1] sm:$0xff]
    %v29 = vld [vmem:[%s1 + $0x8] sm:$0xff]
    %vm30 = vcmask 130048
    %v32 = vsel %vm30, %v26, 0
    %v35 = vsel %vm30, %v27, 0
    %37 = vmatpush.msra.mxu0 0.0
    %38 = vmatpush.msra.mxu0 0.0
    %39 = vmatpush.msra.mxu0 0.0
    %40 = vmatpush.msra.mxu0 0.0
    %41 = vmatpush.msra.mxu0 0.0
    %42 = vmatpush.msra.mxu0 0.0
    %43 = vmatpush.msra.mxu0 0.0
    %44 = vmatpush.msra.mxu0 0.0
    %45 = vmatpush.msra.mxu0 0.0
    %46 = vmatpush.msra.mxu0 0.0
    %47 = vmatpush.msra.mxu0 0.0
    %48 = vmatpush.msra.mxu0 0.0
    %49 = vmatpush.msra.mxu0 0.0
    %50 = vmatpush.msra.mxu0 0.0
    %v51 = vand.u32 %v29, 4294901760
    %52 = vmatpush.msra.mxu0 %v51
    %v53 = vand.u32 %v28, 4294901760
    %54 = vmatpush.msra.mxu0 %v53
    %v55 = vand.u32 %v32, 4294901760
    %v56 = vsub.f32 %v32, %v55
    %v57 = vand.u32 %v56, 4294901760
    %v58 = vsub.f32 %v56, %v57
    %v59 = vand.u32 %v58, 4294901760
    %60 = vmatmul.f32.gmra.mxu0 %v59
    %v61 = vpop.f32.mrf.mxu0
    %v62 = vadd.f32 0.0, %v61
    %v63 = vand.u32 %v35, 4294901760
    %v64 = vsub.f32 %v35, %v63
    %v65 = vand.u32 %v64, 4294901760
    %v66 = vsub.f32 %v64, %v65
    %v67 = vand.u32 %v66, 4294901760
    %68 = vmatmul.f32.gmra.mxu0 %v67
    %v69 = vpop.f32.mrf.mxu0
    %v70 = vadd.f32 0.0, %v69
    %71 = vdwg.mxu0
    %72 = vmatpush.msra.mxu0 0.0
    %73 = vmatpush.msra.mxu0 0.0
    %74 = vmatpush.msra.mxu0 0.0
    %75 = vmatpush.msra.mxu0 0.0
    %76 = vmatpush.msra.mxu0 0.0
    %77 = vmatpush.msra.mxu0 0.0
    %78 = vmatpush.msra.mxu0 0.0
    %79 = vmatpush.msra.mxu0 0.0
    %80 = vmatpush.msra.mxu0 0.0
    %81 = vmatpush.msra.mxu0 0.0
    %82 = vmatpush.msra.mxu0 0.0
    %83 = vmatpush.msra.mxu0 0.0
    %84 = vmatpush.msra.mxu0 0.0
    %85 = vmatpush.msra.mxu0 0.0
    %v86 = vand.u32 %v29, 4294901760
    %v87 = vsub.f32 %v29, %v86
    %v88 = vand.u32 %v87, 4294901760
    %v89 = vsub.f32 %v87, %v88
    %v90 = vand.u32 %v89, 4294901760
    %91 = vmatpush.msra.mxu0 %v90
    %v92 = vand.u32 %v28, 4294901760
    %v93 = vsub.f32 %v28, %v92
    %v94 = vand.u32 %v93, 4294901760
    %v95 = vsub.f32 %v93, %v94
    %v96 = vand.u32 %v95, 4294901760
    %97 = vmatpush.msra.mxu0 %v96
    %v98 = vand.u32 %v32, 4294901760
    %99 = vmatmul.f32.gmra.mxu0 %v98
    %v100 = vpop.f32.mrf.mxu0
    %v101 = vadd.f32 %v62, %v100
    %v102 = vand.u32 %v35, 4294901760
    %103 = vmatmul.f32.gmra.mxu0 %v102
    %v104 = vpop.f32.mrf.mxu0
    %v105 = vadd.f32 %v70, %v104
    %106 = vdwg.mxu0
    %107 = vmatpush.msra.mxu0 0.0
    %108 = vmatpush.msra.mxu0 0.0
    %109 = vmatpush.msra.mxu0 0.0
    %110 = vmatpush.msra.mxu0 0.0
    %111 = vmatpush.msra.mxu0 0.0
    %112 = vmatpush.msra.mxu0 0.0
    %113 = vmatpush.msra.mxu0 0.0
    %114 = vmatpush.msra.mxu0 0.0
    %115 = vmatpush.msra.mxu0 0.0
    %116 = vmatpush.msra.mxu0 0.0
    %117 = vmatpush.msra.mxu0 0.0
    %118 = vmatpush.msra.mxu0 0.0
    %119 = vmatpush.msra.mxu0 0.0
    %120 = vmatpush.msra.mxu0 0.0
    %v121 = vand.u32 %v29, 4294901760
    %v122 = vsub.f32 %v29, %v121
    %123 = vmatpush.msra.mxu0 %v122
    %v124 = vand.u32 %v28, 4294901760
    %v125 = vsub.f32 %v28, %v124
    %126 = vmatpush.msra.mxu0 %v125
    %v127 = vand.u32 %v32, 4294901760
    %v128 = vsub.f32 %v32, %v127
    %129 = vmatmul.f32.gmra.mxu0 %v128
    %v130 = vpop.f32.mrf.mxu0
    %v131 = vadd.f32 %v101, %v130
    %v132 = vand.u32 %v35, 4294901760
    %v133 = vsub.f32 %v35, %v132
    %134 = vmatmul.f32.gmra.mxu0 %v133
    %v135 = vpop.f32.mrf.mxu0
    %v136 = vadd.f32 %v105, %v135
    %137 = vdwg.mxu0
    %138 = vmatpush.msra.mxu0 0.0
    %139 = vmatpush.msra.mxu0 0.0
    %140 = vmatpush.msra.mxu0 0.0
    %141 = vmatpush.msra.mxu0 0.0
    %142 = vmatpush.msra.mxu0 0.0
    %143 = vmatpush.msra.mxu0 0.0
    %144 = vmatpush.msra.mxu0 0.0
    %145 = vmatpush.msra.mxu0 0.0
    %146 = vmatpush.msra.mxu0 0.0
    %147 = vmatpush.msra.mxu0 0.0
    %148 = vmatpush.msra.mxu0 0.0
    %149 = vmatpush.msra.mxu0 0.0
    %150 = vmatpush.msra.mxu0 0.0
    %151 = vmatpush.msra.mxu0 0.0
    %v152 = vand.u32 %v29, 4294901760
    %153 = vmatpush.msra.mxu0 %v152
    %v154 = vand.u32 %v28, 4294901760
    %155 = vmatpush.msra.mxu0 %v154
    %v156 = vand.u32 %v32, 4294901760
    %v157 = vsub.f32 %v32, %v156
    %v158 = vand.u32 %v157, 4294901760
    %159 = vmatmul.f32.gmra.mxu0 %v158
    %v160 = vpop.f32.mrf.mxu0
    %v161 = vadd.f32 %v131, %v160
    %v162 = vand.u32 %v35, 4294901760
    %v163 = vsub.f32 %v35, %v162
    %v164 = vand.u32 %v163, 4294901760
    %165 = vmatmul.f32.gmra.mxu0 %v164
    %v166 = vpop.f32.mrf.mxu0
    %v167 = vadd.f32 %v136, %v166
    %168 = vdwg.mxu0
    %169 = vmatpush.msra.mxu0 0.0
    %170 = vmatpush.msra.mxu0 0.0
    %171 = vmatpush.msra.mxu0 0.0
    %172 = vmatpush.msra.mxu0 0.0
    %173 = vmatpush.msra.mxu0 0.0
    %174 = vmatpush.msra.mxu0 0.0
    %175 = vmatpush.msra.mxu0 0.0
    %176 = vmatpush.msra.mxu0 0.0
    %177 = vmatpush.msra.mxu0 0.0
    %178 = vmatpush.msra.mxu0 0.0
    %179 = vmatpush.msra.mxu0 0.0
    %180 = vmatpush.msra.mxu0 0.0
    %181 = vmatpush.msra.mxu0 0.0
    %182 = vmatpush.msra.mxu0 0.0
    %v183 = vand.u32 %v29, 4294901760
    %v184 = vsub.f32 %v29, %v183
    %v185 = vand.u32 %v184, 4294901760
    %186 = vmatpush.msra.mxu0 %v185
    %v187 = vand.u32 %v28, 4294901760
    %v188 = vsub.f32 %v28, %v187
    %v189 = vand.u32 %v188, 4294901760
    %190 = vmatpush.msra.mxu0 %v189
    %v191 = vand.u32 %v32, 4294901760
    %192 = vmatmul.f32.gmra.mxu0 %v191
    %v193 = vpop.f32.mrf.mxu0
    %v194 = vadd.f32 %v161, %v193
    %v195 = vand.u32 %v35, 4294901760
    %196 = vmatmul.f32.gmra.mxu0 %v195
    %v197 = vpop.f32.mrf.mxu0
    %v198 = vadd.f32 %v167, %v197
    %199 = vdwg.mxu0
    %200 = vmatpush.msra.mxu0 0.0
    %201 = vmatpush.msra.mxu0 0.0
    %202 = vmatpush.msra.mxu0 0.0
    %203 = vmatpush.msra.mxu0 0.0
    %204 = vmatpush.msra.mxu0 0.0
    %205 = vmatpush.msra.mxu0 0.0
    %206 = vmatpush.msra.mxu0 0.0
    %207 = vmatpush.msra.mxu0 0.0
    %208 = vmatpush.msra.mxu0 0.0
    %209 = vmatpush.msra.mxu0 0.0
    %210 = vmatpush.msra.mxu0 0.0
    %211 = vmatpush.msra.mxu0 0.0
    %212 = vmatpush.msra.mxu0 0.0
    %213 = vmatpush.msra.mxu0 0.0
    %v214 = vand.u32 %v29, 4294901760
    %215 = vmatpush.msra.mxu0 %v214
    %v216 = vand.u32 %v28, 4294901760
    %217 = vmatpush.msra.mxu0 %v216
    %v218 = vand.u32 %v32, 4294901760
    %219 = vmatmul.f32.gmra.mxu0 %v218
    %v220 = vpop.f32.mrf.mxu0
    %v221 = vadd.f32 %v194, %v220
    %v222 = vand.u32 %v35, 4294901760
    %223 = vmatmul.f32.gmra.mxu0 %v222
    %v224 = vpop.f32.mrf.mxu0
    %v225 = vadd.f32 %v198, %v224
    %226 = vdwg.mxu0
    %227 = vst [vmem:[#allocation2] sm:$0xff] %v221
    %228 = vst [vmem:[#allocation2 + $0x8] sm:$0xff] %v225
    // Predicated region
    $region10: #{tpu_custom_call.1} parent=1 // pred_check
      _
    $region11: #{tpu_custom_call.1} parent=1 // pred_check_branch
      %230 = sbr.rel (0) target = $region13
    $region12: #{tpu_custom_call.1} parent=1 // pred_region
      %232 = vsyncadd [#allocation3], 0
      %s233 = sshll.u32 [#allocation2], 4
      %s234 = int_to_ptr.vmem [resolvable:$true] %s233
      %s235 = sshll.u32 %s2, 4
      %s236 = int_to_ptr.hbm [resolvable:$true] %s235
      %241 = dma.vmem_to_hbm [thread:$0]  %s234, 256, %s236, [#allocation3], 128, 128, 8
    $region13: #{tpu_custom_call.1} parent=1 // pred_fallthru
      _
    // Predicated region
    $region14: #{tpu_custom_call.1} parent=1 // pred_check
      _
    $region15: #{tpu_custom_call.1} parent=1 // pred_check_branch
      %243 = sbr.rel (0) target = $region17
    $region16: #{tpu_custom_call.1} parent=1 // pred_region
      %245 = dma.done [#allocation3], 256
    $region17: #{tpu_custom_call.1} parent=1 // pred_fallthru
      _
    %246 = vsyncpa [#allocation3], 1

// kernel: tpu_custom_call.1
$region0: #{tpu_custom_call.1}
  #allocation0 [shape = 'u32[]', space=smem, size = 0x4, offset = 0x4, fixed_abs, tag = 'smem constant byte address 0x4 - core index']
  #allocation1 [shape = 'u32[72,128]{1,0:T(1,128)}', space=vmem, size = 0x9000, scoped, tag = 'internal scratch']
  %s0 = inlined_call_operand.vmem [shape: s32[1,16,1], index: 0, kind: input, shape index: {}]
  %s1 = inlined_call_operand.vmem [shape: f32[16,128], index: 1, kind: input, shape index: {}]
  %s2 = inlined_call_operand.hbm [shape: f32[16,128], index: 2, kind: output, shape index: {}]
  %s3 = sld [smem:[#allocation0]]
  $region18: #{tpu_custom_call.1} parent=0
    _
  %s5 = ssub.s32 1, %s3
  %s6 = scalar_select 0, %s5, %s3
  $region1: #{tpu_custom_call.1} parent=0
    #allocation2 [shape = 'u8[8192]{0}', space=vmem, size = 0x2000, scoped, tag = 'output window, operand 0, single buffered']
    #allocation3 [shape = 's32[1]{0}', space=sflag, size = 0x4, scoped, tag = 'scoped memory for tpu_custom_call.1']
    %7 = vsyncpa [#allocation3], 0
    // Predicated region
    $region2: #{tpu_custom_call.1} parent=1 // pred_check
      _
    $region3: #{tpu_custom_call.1} parent=1 // pred_check_branch
      %9 = sbr.rel (0) target = $region5
    $region4: #{tpu_custom_call.1} parent=1 // pred_region
      _
    $region5: #{tpu_custom_call.1} parent=1 // pred_fallthru
      _
    // Predicated region
    $region6: #{tpu_custom_call.1} parent=1 // pred_check
      _
    $region7: #{tpu_custom_call.1} parent=1 // pred_check_branch
      %11 = sbr.rel (0) target = $region9
    $region8: #{tpu_custom_call.1} parent=1 // pred_region
      _
    $region9: #{tpu_custom_call.1} parent=1 // pred_fallthru
      _
    %v12 = vld [vmem:[%s0] sm:$0xff]
    %v13 = vld [vmem:[%s0 + $0x8] sm:$0xff]
    %v14 = vlaneseq
    %v15 = vand.u32 %v14, 127
    %16 = vset.pattern.permute.xlu0 0
    %17 = vperm.xlu0 %16, %v12
    %v18 = vpop.permute.xlu0 %17
    %19 = vset.pattern.permute.xlu0 0
    %20 = vperm.xlu0 %19, %v13
    %v21 = vpop.permute.xlu0 %20
    %vm22 = vcmp.eq.s32.totalorder %v15, %v18
    %vm23 = vcmp.eq.s32.totalorder %v15, %v21
    %v24 = vsel %vm22, 1, 0
    %v25 = vsel %vm23, 1, 0
    %v26 = vcvt.s32.f32 %v24
    %v27 = vcvt.s32.f32 %v25
    %v28 = vld [vmem:[%s1] sm:$0xff]
    %v29 = vld [vmem:[%s1 + $0x8] sm:$0xff]
    %vm30 = vcmask 130048
    %v32 = vsel %vm30, %v26, 0
    %v35 = vsel %vm30, %v27, 0
    %37 = vmatpush.msra.mxu0 0.0
    %38 = vmatpush.msra.mxu0 0.0
    %39 = vmatpush.msra.mxu0 0.0
    %40 = vmatpush.msra.mxu0 0.0
    %41 = vmatpush.msra.mxu0 0.0
    %42 = vmatpush.msra.mxu0 0.0
    %43 = vmatpush.msra.mxu0 0.0
    %44 = vmatpush.msra.mxu0 0.0
    %45 = vmatpush.msra.mxu0 0.0
    %46 = vmatpush.msra.mxu0 0.0
    %47 = vmatpush.msra.mxu0 0.0
    %48 = vmatpush.msra.mxu0 0.0
    %49 = vmatpush.msra.mxu0 0.0
    %50 = vmatpush.msra.mxu0 0.0
    %v51 = vand.u32 %v29, 4294901760
    %52 = vmatpush.msra.mxu0 %v51
    %v53 = vand.u32 %v28, 4294901760
    %54 = vmatpush.msra.mxu0 %v53
    %v55 = vand.u32 %v32, 4294901760
    %v56 = vsub.f32 %v32, %v55
    %v57 = vand.u32 %v56, 4294901760
    %v58 = vsub.f32 %v56, %v57
    %v59 = vand.u32 %v58, 4294901760
    %60 = vmatmul.f32.gmra.mxu0 %v59
    %v61 = vpop.f32.mrf.mxu0
    %v62 = vadd.f32 0.0, %v61
    %v63 = vand.u32 %v35, 4294901760
    %v64 = vsub.f32 %v35, %v63
    %v65 = vand.u32 %v64, 4294901760
    %v66 = vsub.f32 %v64, %v65
    %v67 = vand.u32 %v66, 4294901760
    %68 = vmatmul.f32.gmra.mxu0 %v67
    %v69 = vpop.f32.mrf.mxu0
    %v70 = vadd.f32 0.0, %v69
    %71 = vdwg.mxu0
    %72 = vmatpush.msra.mxu0 0.0
    %73 = vmatpush.msra.mxu0 0.0
    %74 = vmatpush.msra.mxu0 0.0
    %75 = vmatpush.msra.mxu0 0.0
    %76 = vmatpush.msra.mxu0 0.0
    %77 = vmatpush.msra.mxu0 0.0
    %78 = vmatpush.msra.mxu0 0.0
    %79 = vmatpush.msra.mxu0 0.0
    %80 = vmatpush.msra.mxu0 0.0
    %81 = vmatpush.msra.mxu0 0.0
    %82 = vmatpush.msra.mxu0 0.0
    %83 = vmatpush.msra.mxu0 0.0
    %84 = vmatpush.msra.mxu0 0.0
    %85 = vmatpush.msra.mxu0 0.0
    %v86 = vand.u32 %v29, 4294901760
    %v87 = vsub.f32 %v29, %v86
    %v88 = vand.u32 %v87, 4294901760
    %v89 = vsub.f32 %v87, %v88
    %v90 = vand.u32 %v89, 4294901760
    %91 = vmatpush.msra.mxu0 %v90
    %v92 = vand.u32 %v28, 4294901760
    %v93 = vsub.f32 %v28, %v92
    %v94 = vand.u32 %v93, 4294901760
    %v95 = vsub.f32 %v93, %v94
    %v96 = vand.u32 %v95, 4294901760
    %97 = vmatpush.msra.mxu0 %v96
    %v98 = vand.u32 %v32, 4294901760
    %99 = vmatmul.f32.gmra.mxu0 %v98
    %v100 = vpop.f32.mrf.mxu0
    %v101 = vadd.f32 %v62, %v100
    %v102 = vand.u32 %v35, 4294901760
    %103 = vmatmul.f32.gmra.mxu0 %v102
    %v104 = vpop.f32.mrf.mxu0
    %v105 = vadd.f32 %v70, %v104
    %106 = vdwg.mxu0
    %107 = vmatpush.msra.mxu0 0.0
    %108 = vmatpush.msra.mxu0 0.0
    %109 = vmatpush.msra.mxu0 0.0
    %110 = vmatpush.msra.mxu0 0.0
    %111 = vmatpush.msra.mxu0 0.0
    %112 = vmatpush.msra.mxu0 0.0
    %113 = vmatpush.msra.mxu0 0.0
    %114 = vmatpush.msra.mxu0 0.0
    %115 = vmatpush.msra.mxu0 0.0
    %116 = vmatpush.msra.mxu0 0.0
    %117 = vmatpush.msra.mxu0 0.0
    %118 = vmatpush.msra.mxu0 0.0
    %119 = vmatpush.msra.mxu0 0.0
    %120 = vmatpush.msra.mxu0 0.0
    %v121 = vand.u32 %v29, 4294901760
    %v122 = vsub.f32 %v29, %v121
    %123 = vmatpush.msra.mxu0 %v122
    %v124 = vand.u32 %v28, 4294901760
    %v125 = vsub.f32 %v28, %v124
    %126 = vmatpush.msra.mxu0 %v125
    %v127 = vand.u32 %v32, 4294901760
    %v128 = vsub.f32 %v32, %v127
    %129 = vmatmul.f32.gmra.mxu0 %v128
    %v130 = vpop.f32.mrf.mxu0
    %v131 = vadd.f32 %v101, %v130
    %v132 = vand.u32 %v35, 4294901760
    %v133 = vsub.f32 %v35, %v132
    %134 = vmatmul.f32.gmra.mxu0 %v133
    %v135 = vpop.f32.mrf.mxu0
    %v136 = vadd.f32 %v105, %v135
    %137 = vdwg.mxu0
    %138 = vmatpush.msra.mxu0 0.0
    %139 = vmatpush.msra.mxu0 0.0
    %140 = vmatpush.msra.mxu0 0.0
    %141 = vmatpush.msra.mxu0 0.0
    %142 = vmatpush.msra.mxu0 0.0
    %143 = vmatpush.msra.mxu0 0.0
    %144 = vmatpush.msra.mxu0 0.0
    %145 = vmatpush.msra.mxu0 0.0
    %146 = vmatpush.msra.mxu0 0.0
    %147 = vmatpush.msra.mxu0 0.0
    %148 = vmatpush.msra.mxu0 0.0
    %149 = vmatpush.msra.mxu0 0.0
    %150 = vmatpush.msra.mxu0 0.0
    %151 = vmatpush.msra.mxu0 0.0
    %v152 = vand.u32 %v29, 4294901760
    %153 = vmatpush.msra.mxu0 %v152
    %v154 = vand.u32 %v28, 4294901760
    %155 = vmatpush.msra.mxu0 %v154
    %v156 = vand.u32 %v32, 4294901760
    %v157 = vsub.f32 %v32, %v156
    %v158 = vand.u32 %v157, 4294901760
    %159 = vmatmul.f32.gmra.mxu0 %v158
    %v160 = vpop.f32.mrf.mxu0
    %v161 = vadd.f32 %v131, %v160
    %v162 = vand.u32 %v35, 4294901760
    %v163 = vsub.f32 %v35, %v162
    %v164 = vand.u32 %v163, 4294901760
    %165 = vmatmul.f32.gmra.mxu0 %v164
    %v166 = vpop.f32.mrf.mxu0
    %v167 = vadd.f32 %v136, %v166
    %168 = vdwg.mxu0
    %169 = vmatpush.msra.mxu0 0.0
    %170 = vmatpush.msra.mxu0 0.0
    %171 = vmatpush.msra.mxu0 0.0
    %172 = vmatpush.msra.mxu0 0.0
    %173 = vmatpush.msra.mxu0 0.0
    %174 = vmatpush.msra.mxu0 0.0
    %175 = vmatpush.msra.mxu0 0.0
    %176 = vmatpush.msra.mxu0 0.0
    %177 = vmatpush.msra.mxu0 0.0
    %178 = vmatpush.msra.mxu0 0.0
    %179 = vmatpush.msra.mxu0 0.0
    %180 = vmatpush.msra.mxu0 0.0
    %181 = vmatpush.msra.mxu0 0.0
    %182 = vmatpush.msra.mxu0 0.0
    %v183 = vand.u32 %v29, 4294901760
    %v184 = vsub.f32 %v29, %v183
    %v185 = vand.u32 %v184, 4294901760
    %186 = vmatpush.msra.mxu0 %v185
    %v187 = vand.u32 %v28, 4294901760
    %v188 = vsub.f32 %v28, %v187
    %v189 = vand.u32 %v188, 4294901760
    %190 = vmatpush.msra.mxu0 %v189
    %v191 = vand.u32 %v32, 4294901760
    %192 = vmatmul.f32.gmra.mxu0 %v191
    %v193 = vpop.f32.mrf.mxu0
    %v194 = vadd.f32 %v161, %v193
    %v195 = vand.u32 %v35, 4294901760
    %196 = vmatmul.f32.gmra.mxu0 %v195
    %v197 = vpop.f32.mrf.mxu0
    %v198 = vadd.f32 %v167, %v197
    %199 = vdwg.mxu0
    %200 = vmatpush.msra.mxu0 0.0
    %201 = vmatpush.msra.mxu0 0.0
    %202 = vmatpush.msra.mxu0 0.0
    %203 = vmatpush.msra.mxu0 0.0
    %204 = vmatpush.msra.mxu0 0.0
    %205 = vmatpush.msra.mxu0 0.0
    %206 = vmatpush.msra.mxu0 0.0
    %207 = vmatpush.msra.mxu0 0.0
    %208 = vmatpush.msra.mxu0 0.0
    %209 = vmatpush.msra.mxu0 0.0
    %210 = vmatpush.msra.mxu0 0.0
    %211 = vmatpush.msra.mxu0 0.0
    %212 = vmatpush.msra.mxu0 0.0
    %213 = vmatpush.msra.mxu0 0.0
    %v214 = vand.u32 %v29, 4294901760
    %215 = vmatpush.msra.mxu0 %v214
    %v216 = vand.u32 %v28, 4294901760
    %217 = vmatpush.msra.mxu0 %v216
    %v218 = vand.u32 %v32, 4294901760
    %219 = vmatmul.f32.gmra.mxu0 %v218
    %v220 = vpop.f32.mrf.mxu0
    %v221 = vadd.f32 %v194, %v220
    %v222 = vand.u32 %v35, 4294901760
    %223 = vmatmul.f32.gmra.mxu0 %v222
    %v224 = vpop.f32.mrf.mxu0
    %v225 = vadd.f32 %v198, %v224
    %226 = vdwg.mxu0
    %227 = vst [vmem:[#allocation2] sm:$0xff] %v221
    %228 = vst [vmem:[#allocation2 + $0x8] sm:$0xff] %v225
    // Predicated region
    $region10: #{tpu_custom_call.1} parent=1 // pred_check
      _
    $region11: #{tpu_custom_call.1} parent=1 // pred_check_branch
      %230 = sbr.rel (0) target = $region13
    $region12: #{tpu_custom_call.1} parent=1 // pred_region
      %232 = vsyncadd [#allocation3], 0
      %s233 = sshll.u32 [#allocation2], 4
      %s234 = int_to_ptr.vmem [resolvable:$true] %s233
      %s235 = sshll.u32 %s2, 4
      %s236 = int_to_ptr.hbm [resolvable:$true] %s235
      %241 = dma.vmem_to_hbm [thread:$0]  %s234, 256, %s236, [#allocation3], 128, 128, 8
    $region13: #{tpu_custom_call.1} parent=1 // pred_fallthru
      _
    // Predicated region
    $region14: #{tpu_custom_call.1} parent=1 // pred_check
      _
    $region15: #{tpu_custom_call.1} parent=1 // pred_check_branch
      %243 = sbr.rel (0) target = $region17
    $region16: #{tpu_custom_call.1} parent=1 // pred_region
      %245 = dma.done [#allocation3], 256
    $region17: #{tpu_custom_call.1} parent=1 // pred_fallthru
      _
    %246 = vsyncpa [#allocation3], 1

</llo_original>
